<compile_context>
chip_gen: v6e
topology: v6e:2x2x1
jax: 0.10.0
libtpu: 0.0.40
codegen_flags: <defaults>
</compile_context>

<pallas_src>
import functools

import jax
import jax.numpy as jnp
from jax.experimental import pallas as pl
from jax.experimental.pallas import tpu as pltpu

NEG_SLOPE = 0.01  # PyTorch nn.LeakyReLU default


def _leaky_relu(x):
    return jnp.where(x > 0, x, NEG_SLOPE * x)


def prediction_kernel(emb_i_ref, emb_all_ref, w1t_ref, w1b_ref, b1_ref,
                      w2_ref, b2_ref, w3r_ref, b3_ref, o_ref, *, compute_dtype):
    """One (batch b, i-tile t) grid step.

    emb_i_ref:   (TI, E)  rows i0 .. i0+TI of emb[b]
    emb_all_ref: (N,  E)  all rows of emb[b]
    o_ref:       (TI, N)  out[b, i0:i0+TI, :]
    """
    emb_i = emb_i_ref[...]        # (TI, E) f32
    emb_all = emb_all_ref[...]    # (N,  E) f32

    # Layer 1, split:  P = emb_i @ W1_top  (TI, H1);  Q = emb_all @ W1_bot  (N, H1)
    p = jnp.dot(emb_i.astype(compute_dtype), w1t_ref[...].astype(compute_dtype),
                preferred_element_type=jnp.float32)
    q = jnp.dot(emb_all.astype(compute_dtype), w1b_ref[...].astype(compute_dtype),
                preferred_element_type=jnp.float32)

    # h1[i, j, :] = leaky(P[i] + Q[j] + b1)   -> (TI, N, H1), f32 VPU work
    h1 = _leaky_relu(p[:, None, :] + q[None, :, :] + b1_ref[...])

    # Layer 2: batched (N, H1) @ (H1, H2) over the TI rows -> (TI, N, H2)
    h2 = _leaky_relu(
        jnp.einsum("inh,hk->ink", h1.astype(compute_dtype),
                   w2_ref[...].astype(compute_dtype),
                   preferred_element_type=jnp.float32)
        + b2_ref[...])

    # Layer 3 (H2 -> 1): VPU multiply + lane reduce instead of a width-1 MXU matmul.
    out = jnp.sum(h2 * w3r_ref[...], axis=-1) + b3_ref[...]   # (TI, N), lane-dense over N
    o_ref[...] = out.astype(o_ref.dtype)


def _choose_i_tile(n_nodes, h1, h2, act_budget_bytes=4 << 20):
    """Pick TI (rows of `i` per grid step) so (TI, N, H1/H2) activations fit a VMEM budget."""
    bytes_per_row = n_nodes * (h1 + h2) * 4 * 2   # f32 h1+h2 plus headroom for bf16 copies
    ti = max(1, act_budget_bytes // max(bytes_per_row, 1))
    if ti >= n_nodes:
        return n_nodes
    ti = (ti // 8) * 8                            # sublane multiple for the (8,128) tiling
    while ti >= 8 and n_nodes % ti != 0:          # grid axis must divide evenly
        ti -= 8
    # TODO(synk): ragged N (no multiple-of-8 divisor) falls back to a single big tile.
    return ti if ti >= 8 else n_nodes


def prediction_layer(embeddings, params, n_nodes, *, compute_dtype=jnp.bfloat16):
    """embeddings: (B, N, E) float32 -> (B, N, N) float32."""
    B, N, E = embeddings.shape
    assert N == n_nodes
    w1, b1, w2, b2, w3, b3 = params
    H1 = w1.shape[1]            # E
    H2 = w2.shape[1]            # E // 2

    # Weight prep (glue): split W1 rows; lay w3 out as a (1, H2) row for the VPU reduce.
    w1_top = w1[:E]             # (E, H1)
    w1_bot = w1[E:]             # (E, H1)
    w3_row = w3.reshape(1, H2)  # (1, H2)

    TI = _choose_i_tile(N, H1, H2)
    grid = (B, N // TI)

    flops = 2 * B * (2 * N * E * H1) + 2 * B * N * N * H1 * H2 + 2 * B * N * N * H2
    bytes_accessed = (2 * B * N * E * 4
                      + (2 * E * H1 + H1 * H2 + H1 + 2 * H2 + 1) * 4
                      + B * N * N * 4)

    kernel = functools.partial(prediction_kernel, compute_dtype=compute_dtype)

    out = pl.pallas_call(
        kernel,
        out_shape=jax.ShapeDtypeStruct((B, N, N), jnp.float32),
        grid_spec=pltpu.PrefetchScalarGridSpec(
            num_scalar_prefetch=0,
            grid=grid,
            in_specs=[
                # i-tile of embeddings for this grid step
                pl.BlockSpec((pl.Squeezed(), TI, E), lambda b, t: (b, t, 0)),
                # all embeddings of this batch element (for Q)
                pl.BlockSpec((pl.Squeezed(), N, E), lambda b, t: (b, 0, 0)),
                # weights: constant index maps -> stay VMEM-resident across the grid
                pl.BlockSpec((E, H1), lambda b, t: (0, 0)),
                pl.BlockSpec((E, H1), lambda b, t: (0, 0)),
                pl.BlockSpec((1, H1), lambda b, t: (0, 0)),
                pl.BlockSpec((H1, H2), lambda b, t: (0, 0)),
                pl.BlockSpec((1, H2), lambda b, t: (0, 0)),
                pl.BlockSpec((1, H2), lambda b, t: (0, 0)),
                pl.BlockSpec((1, 1), lambda b, t: (0, 0)),
            ],
            out_specs=pl.BlockSpec((pl.Squeezed(), TI, N), lambda b, t: (b, t, 0)),
        ),
        compiler_params=pltpu.CompilerParams(
            dimension_semantics=("parallel", "parallel"),
            vmem_limit_bytes=32 * 1024 * 1024,
        ),
        cost_estimate=pl.CostEstimate(
            flops=int(flops), transcendentals=0, bytes_accessed=int(bytes_accessed)),
    )(embeddings, embeddings, w1_top, w1_bot, b1, w2, b2, w3_row, b3)

    return out


def reference(embeddings, params, n_nodes):
    """Pure-JAX reference mirroring the PyTorch forward (pair tensor materialized)."""
    w1, b1, w2, b2, w3, b3 = params
    B, N, E = embeddings.shape
    A = jnp.repeat(embeddings, N, axis=1)        # A[b, i*N+j] = emb[b, i]
    C = jnp.tile(embeddings, (1, N, 1))          # C[b, i*N+j] = emb[b, j]
    x = jnp.concatenate([A, C], axis=2)          # (B, N*N, 2E)
    h1 = _leaky_relu(x @ w1 + b1)
    h2 = _leaky_relu(h1 @ w2 + b2)
    out = h2 @ w3 + b3
    return out.reshape(B, N, N)


def init_params(key, embedding_dim):
    """Deterministic synthetic init; weights stored as (in, out)."""
    E = embedding_dim
    H2 = E // 2
    ks = jax.random.split(key, 6)
    w1 = 0.1 * jax.random.normal(ks[0], (2 * E, E), jnp.float32)
    b1 = 0.1 * jax.random.normal(ks[1], (1, E), jnp.float32)
    w2 = 0.1 * jax.random.normal(ks[2], (E, H2), jnp.float32)
    b2 = 0.1 * jax.random.normal(ks[3], (1, H2), jnp.float32)
    w3 = 0.1 * jax.random.normal(ks[4], (H2, 1), jnp.float32)
    b3 = 0.1 * jax.random.normal(ks[5], (1, 1), jnp.float32)
    return (w1, b1, w2, b2, w3, b3)


if __name__ == "__main__":
    B, n_nodes, embedding_dim = 2, 8, 32

    key = jax.random.PRNGKey(0)
    k_emb, k_par = jax.random.split(key)
    embeddings = jax.random.normal(k_emb, (B, n_nodes, embedding_dim), jnp.float32)
    params = init_params(k_par, embedding_dim)

    ref = jax.block_until_ready(reference(embeddings, params, n_nodes))

    # Exact-semantics path (f32 MXU inputs) — tight check.
    out_f32 = jax.block_until_ready(
        prediction_layer(embeddings, params, n_nodes, compute_dtype=jnp.float32))
    assert out_f32.shape == (B, n_nodes, n_nodes)
    assert jnp.allclose(out_f32, ref, atol=1e-4, rtol=1e-4), "f32 mismatch vs reference"

    # Performance path (bf16 MXU inputs, f32 accumulation) — loose check.
    out_bf16 = jax.block_until_ready(
        prediction_layer(embeddings, params, n_nodes, compute_dtype=jnp.bfloat16))
    assert out_bf16.shape == (B, n_nodes, n_nodes)
    assert jnp.allclose(out_bf16, ref, atol=5e-2, rtol=5e-2), "bf16 mismatch vs reference"

    print("KERNEL_OK")
</pallas_src>

<mosaic_0001>
module attributes {stable_mosaic.version = 11 : i64} {
  func.func @prediction_kernel(%arg0: i32, %arg1: i32, %arg2: memref<1x8x32xf32, #tpu.memory_space<vmem>>, %arg3: memref<1x8x32xf32, #tpu.memory_space<vmem>>, %arg4: memref<32x32xf32, #tpu.memory_space<vmem>>, %arg5: memref<32x32xf32, #tpu.memory_space<vmem>>, %arg6: memref<1x32xf32, #tpu.memory_space<vmem>>, %arg7: memref<32x16xf32, #tpu.memory_space<vmem>>, %arg8: memref<1x16xf32, #tpu.memory_space<vmem>>, %arg9: memref<1x16xf32, #tpu.memory_space<vmem>>, %arg10: memref<1x1xf32, #tpu.memory_space<vmem>>, %arg11: memref<1x8x8xf32, #tpu.memory_space<vmem>>) attributes {dimension_semantics = [#tpu.dimension_semantics<parallel>, #tpu.dimension_semantics<parallel>], iteration_bounds = array<i64: 2, 1>, scalar_prefetch = 0 : i64, scratch_operands = 0 : i64, tpu.core_type = #tpu.core_type<tc>, window_params = [{transform_indices = @transform_0, window_bounds = array<i64: 1, 8, 32>}, {transform_indices = @transform_1, window_bounds = array<i64: 1, 8, 32>}, {pipeline_mode = #tpu.pipeline_mode<synchronous>, transform_indices = @transform_2, window_bounds = array<i64: 32, 32>}, {pipeline_mode = #tpu.pipeline_mode<synchronous>, transform_indices = @transform_3, window_bounds = array<i64: 32, 32>}, {pipeline_mode = #tpu.pipeline_mode<synchronous>, transform_indices = @transform_4, window_bounds = array<i64: 1, 32>}, {pipeline_mode = #tpu.pipeline_mode<synchronous>, transform_indices = @transform_5, window_bounds = array<i64: 32, 16>}, {pipeline_mode = #tpu.pipeline_mode<synchronous>, transform_indices = @transform_6, window_bounds = array<i64: 1, 16>}, {pipeline_mode = #tpu.pipeline_mode<synchronous>, transform_indices = @transform_7, window_bounds = array<i64: 1, 16>}, {pipeline_mode = #tpu.pipeline_mode<synchronous>, transform_indices = @transform_8, window_bounds = array<i64: 1, 1>}, {transform_indices = @transform_9, window_bounds = array<i64: 1, 8, 8>}]} {
    %c0 = arith.constant 0 : index
    %c0_0 = arith.constant 0 : index
    %c0_1 = arith.constant 0 : index
    %0 = vector.load %arg2[%c0, %c0_0, %c0_1] : memref<1x8x32xf32, #tpu.memory_space<vmem>>, vector<1x8x32xf32>
    %1 = vector.shape_cast %0 : vector<1x8x32xf32> to vector<8x32xf32>
    %c0_2 = arith.constant 0 : index
    %c0_3 = arith.constant 0 : index
    %c0_4 = arith.constant 0 : index
    %2 = vector.load %arg3[%c0_2, %c0_3, %c0_4] : memref<1x8x32xf32, #tpu.memory_space<vmem>>, vector<1x8x32xf32>
    %3 = vector.shape_cast %2 : vector<1x8x32xf32> to vector<8x32xf32>
    %c0_5 = arith.constant 0 : index
    %c0_6 = arith.constant 0 : index
    %4 = vector.load %arg4[%c0_5, %c0_6] : memref<32x32xf32, #tpu.memory_space<vmem>>, vector<32x32xf32>
    %cst = arith.constant dense<0.000000e+00> : vector<8x32xf32>
    %5 = tpu.matmul %1, %4, %cst {dimension_numbers = #tpu.dot_dimension_numbers<[1], [0], [0], [1], [0, 0, 1, 1], [], []>} : vector<8x32xf32>, vector<32x32xf32>, vector<8x32xf32> -> vector<8x32xf32>
    %c0_7 = arith.constant 0 : index
    %c0_8 = arith.constant 0 : index
    %6 = vector.load %arg5[%c0_7, %c0_8] : memref<32x32xf32, #tpu.memory_space<vmem>>, vector<32x32xf32>
    %cst_9 = arith.constant dense<0.000000e+00> : vector<8x32xf32>
    %7 = tpu.matmul %3, %6, %cst_9 {dimension_numbers = #tpu.dot_dimension_numbers<[1], [0], [0], [1], [0, 0, 1, 1], [], []>} : vector<8x32xf32>, vector<32x32xf32>, vector<8x32xf32> -> vector<8x32xf32>
    %8 = vector.shape_cast %5 : vector<8x32xf32> to vector<8x1x32xf32>
    %9 = vector.shape_cast %7 : vector<8x32xf32> to vector<1x8x32xf32>
    %10 = vector.broadcast %8 : vector<8x1x32xf32> to vector<8x8x32xf32>
    %11 = vector.broadcast %9 : vector<1x8x32xf32> to vector<8x8x32xf32>
    %12 = arith.addf %10, %11 : vector<8x8x32xf32>
    %c0_10 = arith.constant 0 : index
    %c0_11 = arith.constant 0 : index
    %13 = vector.load %arg6[%c0_10, %c0_11] : memref<1x32xf32, #tpu.memory_space<vmem>>, vector<1x32xf32>
    %14 = vector.shape_cast %13 : vector<1x32xf32> to vector<1x1x32xf32>
    %15 = vector.broadcast %14 : vector<1x1x32xf32> to vector<8x8x32xf32>
    %16 = arith.addf %12, %15 : vector<8x8x32xf32>
    %cst_12 = arith.constant 0.000000e+00 : f32
    %17 = vector.broadcast %cst_12 : f32 to vector<8x8x32xf32>
    %18 = arith.cmpf ogt, %16, %17 : vector<8x8x32xf32>
    %cst_13 = arith.constant 0.00999999977 : f32
    %19 = vector.broadcast %cst_13 : f32 to vector<8x8x32xf32>
    %20 = arith.mulf %19, %16 : vector<8x8x32xf32>
    %21 = arith.select %18, %16, %20 : vector<8x8x32xi1>, vector<8x8x32xf32>
    %c0_14 = arith.constant 0 : index
    %c0_15 = arith.constant 0 : index
    %22 = vector.load %arg7[%c0_14, %c0_15] : memref<32x16xf32, #tpu.memory_space<vmem>>, vector<32x16xf32>
    "tpu.trace_start"() <{level = 10 : i32, message = "inh,hk->ink"}> : () -> ()
    %cst_16 = arith.constant dense<0.000000e+00> : vector<8x8x16xf32>
    %23 = tpu.matmul %21, %22, %cst_16 {dimension_numbers = #tpu.dot_dimension_numbers<[2], [0], [0, 1], [1], [0, 0, 0, 1, 1, 1], [], []>} : vector<8x8x32xf32>, vector<32x16xf32>, vector<8x8x16xf32> -> vector<8x8x16xf32>
    "tpu.trace_stop"() : () -> ()
    %c0_17 = arith.constant 0 : index
    %c0_18 = arith.constant 0 : index
    %24 = vector.load %arg8[%c0_17, %c0_18] : memref<1x16xf32, #tpu.memory_space<vmem>>, vector<1x16xf32>
    %25 = vector.shape_cast %24 : vector<1x16xf32> to vector<1x1x16xf32>
    %26 = vector.broadcast %25 : vector<1x1x16xf32> to vector<8x8x16xf32>
    %27 = arith.addf %23, %26 : vector<8x8x16xf32>
    %cst_19 = arith.constant 0.000000e+00 : f32
    %28 = vector.broadcast %cst_19 : f32 to vector<8x8x16xf32>
    %29 = arith.cmpf ogt, %27, %28 : vector<8x8x16xf32>
    %cst_20 = arith.constant 0.00999999977 : f32
    %30 = vector.broadcast %cst_20 : f32 to vector<8x8x16xf32>
    %31 = arith.mulf %30, %27 : vector<8x8x16xf32>
    %32 = arith.select %29, %27, %31 : vector<8x8x16xi1>, vector<8x8x16xf32>
    %c0_21 = arith.constant 0 : index
    %c0_22 = arith.constant 0 : index
    %33 = vector.load %arg9[%c0_21, %c0_22] : memref<1x16xf32, #tpu.memory_space<vmem>>, vector<1x16xf32>
    %34 = vector.shape_cast %33 : vector<1x16xf32> to vector<1x1x16xf32>
    %35 = vector.broadcast %34 : vector<1x1x16xf32> to vector<8x8x16xf32>
    %36 = arith.mulf %32, %35 : vector<8x8x16xf32>
    %cst_23 = arith.constant dense<0.000000e+00> : vector<8x8xf32>
    %37 = vector.multi_reduction <add>, %36, %cst_23 [2] : vector<8x8x16xf32> to vector<8x8xf32>
    %c0_24 = arith.constant 0 : index
    %c0_25 = arith.constant 0 : index
    %38 = vector.load %arg10[%c0_24, %c0_25] : memref<1x1xf32, #tpu.memory_space<vmem>>, vector<1x1xf32>
    %39 = vector.broadcast %38 : vector<1x1xf32> to vector<8x8xf32>
    %40 = arith.addf %37, %39 : vector<8x8xf32>
    %c0_26 = arith.constant 0 : index
    %c0_27 = arith.constant 0 : index
    %c0_28 = arith.constant 0 : index
    %41 = vector.load %arg11[%c0_26, %c0_27, %c0_28] : memref<1x8x8xf32, #tpu.memory_space<vmem>>, vector<1x8x8xf32>
    %42 = vector.shape_cast %41 : vector<1x8x8xf32> to vector<8x8xf32>
    %43 = vector.shape_cast %40 : vector<8x8xf32> to vector<1x8x8xf32>
    tpu.vector_store %arg11[%c0_26, %c0_27, %c0_28], %43 {strides = array<i32>} : memref<1x8x8xf32, #tpu.memory_space<vmem>>, vector<1x8x8xf32>,
    return
  }
  func.func @transform_0(%arg0: i32, %arg1: i32) -> (i32, i32, i32) {
    %c0_i32 = arith.constant 0 : i32
    %c0_i32_0 = arith.constant 0 : i32
    return %arg0, %arg1, %c0_i32 : i32, i32, i32
  }
  func.func @transform_1(%arg0: i32, %arg1: i32) -> (i32, i32, i32) {
    %c0_i32 = arith.constant 0 : i32
    %c0_i32_0 = arith.constant 0 : i32
    %c0_i32_1 = arith.constant 0 : i32
    return %arg0, %c0_i32, %c0_i32_0 : i32, i32, i32
  }
  func.func @transform_2(%arg0: i32, %arg1: i32) -> (i32, i32) {
    %c0_i32 = arith.constant 0 : i32
    %c0_i32_0 = arith.constant 0 : i32
    %c0_i32_1 = arith.constant 0 : i32
    return %c0_i32, %c0_i32_0 : i32, i32
  }
  func.func @transform_3(%arg0: i32, %arg1: i32) -> (i32, i32) {
    %c0_i32 = arith.constant 0 : i32
    %c0_i32_0 = arith.constant 0 : i32
    %c0_i32_1 = arith.constant 0 : i32
    return %c0_i32, %c0_i32_0 : i32, i32
  }
  func.func @transform_4(%arg0: i32, %arg1: i32) -> (i32, i32) {
    %c0_i32 = arith.constant 0 : i32
    %c0_i32_0 = arith.constant 0 : i32
    %c0_i32_1 = arith.constant 0 : i32
    return %c0_i32, %c0_i32_0 : i32, i32
  }
  func.func @transform_5(%arg0: i32, %arg1: i32) -> (i32, i32) {
    %c0_i32 = arith.constant 0 : i32
    %c0_i32_0 = arith.constant 0 : i32
    %c0_i32_1 = arith.constant 0 : i32
    return %c0_i32, %c0_i32_0 : i32, i32
  }
  func.func @transform_6(%arg0: i32, %arg1: i32) -> (i32, i32) {
    %c0_i32 = arith.constant 0 : i32
    %c0_i32_0 = arith.constant 0 : i32
    %c0_i32_1 = arith.constant 0 : i32
    return %c0_i32, %c0_i32_0 : i32, i32
  }
  func.func @transform_7(%arg0: i32, %arg1: i32) -> (i32, i32) {
    %c0_i32 = arith.constant 0 : i32
    %c0_i32_0 = arith.constant 0 : i32
    %c0_i32_1 = arith.constant 0 : i32
    return %c0_i32, %c0_i32_0 : i32, i32
  }
  func.func @transform_8(%arg0: i32, %arg1: i32) -> (i32, i32) {
    %c0_i32 = arith.constant 0 : i32
    %c0_i32_0 = arith.constant 0 : i32
    %c0_i32_1 = arith.constant 0 : i32
    return %c0_i32, %c0_i32_0 : i32, i32
  }
  func.func @transform_9(%arg0: i32, %arg1: i32) -> (i32, i32, i32) {
    %c0_i32 = arith.constant 0 : i32
    %c0_i32_0 = arith.constant 0 : i32
    return %arg0, %arg1, %c0_i32 : i32, i32, i32
  }
}

</mosaic_0001>

<llo_original>
// kernel: tpu_custom_call.1
$region0: #{tpu_custom_call.1}
  #allocation0 [shape = 'u32[]', space=smem, size = 0x4, offset = 0x4, fixed_abs, tag = 'smem constant byte address 0x4 - core index']
  #allocation1 [shape = 'u32[144,128]{1,0:T(1,128)}', space=vmem, size = 0x12000, scoped, tag = 'internal scratch']
  #allocation2 [shape = 'f32[1,1]{1,0:T(1,128)S(1)}', space=vmem, size = 0x200, scoped, tag = 'scoped memory for tpu_custom_call.1']
  %s0 = inlined_call_operand.vmem [shape: f32[2,8,32], index: 0, kind: input, shape index: {}]
  %s1 = inlined_call_operand.hbm [shape: f32[2,8,32], index: 1, kind: input, shape index: {}]
  %s2 = inlined_call_operand.vmem [shape: f32[32,32], index: 2, kind: input, shape index: {}]
  %s3 = inlined_call_operand.hbm [shape: f32[32,32], index: 3, kind: input, shape index: {}]
  %s4 = inlined_call_operand.vmem [shape: f32[1,32], index: 4, kind: input, shape index: {}]
  %s5 = inlined_call_operand.vmem [shape: f32[32,16], index: 5, kind: input, shape index: {}]
  %s6 = inlined_call_operand.vmem [shape: f32[1,16], index: 6, kind: input, shape index: {}]
  %s7 = inlined_call_operand.vmem [shape: f32[1,16], index: 7, kind: input, shape index: {}]
  %s8 = inlined_call_operand.<no memory space> [shape: f32[1,1], index: 8, kind: input, shape index: {}]
  %s9 = inlined_call_operand.hbm [shape: f32[2,8,8], index: 9, kind: output, shape index: {}]
  %s10 = sld [smem:[#allocation0]]
  $region77: #{tpu_custom_call.1} parent=0
    _
  %s12 = ssub.s32 1, %s10
  %s13 = scalar_select 0, %s12, %s10
  %v14 = vstv %s8
  %15 = vst [vmem:[#allocation2] sm:$0x1] %v14
  $region1: #{tpu_custom_call.1} parent=0
    #allocation3 [shape = 'u8[8192]{0}', space=vmem, size = 0x2000, scoped, tag = 'input window, operand 1']
    #allocation4 [shape = 's32[2]{0}', space=sflag, size = 0x8, scoped, tag = 'scoped memory for tpu_custom_call.1']
    #allocation5 [shape = 's32[2]{0}', space=sflag, size = 0x8, scoped, tag = 'scoped memory for tpu_custom_call.1']
    #allocation6 [shape = 'u8[16384]{0}', space=vmem, size = 0x4000, scoped, tag = 'input window, operand 3, single buffered']
    #allocation7 [shape = 's32[1]{0}', space=sflag, size = 0x4, scoped, tag = 'scoped memory for tpu_custom_call.1']
    #allocation8 [shape = 'u8[8192]{0}', space=vmem, size = 0x2000, scoped, tag = 'output window, operand 0']
    %16 = vsyncpa [#allocation4], 0
    %s17 = scalar_lea.sflag [#allocation4], 1
    %18 = vsyncpa %s17, 0
    %19 = vsyncpa [#allocation7], 0
    %20 = vsyncpa [#allocation5], 0
    %s21 = scalar_lea.sflag [#allocation5], 1
    %22 = vsyncpa %s21, 0
    loop: start=0, step=1, limit=4
    $region2: #{tpu_custom_call.1} parent=1 // loop_pre_header
      _
    $region3: #{tpu_custom_call.1} parent=1 // loop_header
      %s24 = sphi 0, %s28
      %p25 = scmp.ge.s32.totalorder %s24, 4
      %s31 = sphi 0, %s43
      %s32 = sphi 0, %s39
      %s33 = sphi 0, %s31
      %s34 = sphi 0, %s32
      %s35 = sphi 0, %s33
      %s36 = sphi 0, %s34
      %s48 = sphi 0, %s50
      %s51 = sphi 0, %s48
      %s52 = sphi 0, %s51
      %s68 = sphi 0, %s52
      %s74 = sphi 0, %s76
      %s77 = sphi 0, %s74
      %s78 = sphi 0, %s77
      %s94 = sphi 0, %s78
      %s98 = sphi 0, %s98
      %s100 = sphi 0, %s98
      %s101 = sphi 0, %s100
      %s115 = sphi 0, %s101
      %s119 = sphi 0, %s119
      %s121 = sphi 0, %s119
      %s122 = sphi 0, %s121
      %s136 = sphi 0, %s122
      %s140 = sphi 0, %s140
      %s142 = sphi 0, %s140
      %s143 = sphi 0, %s142
      %s157 = sphi 0, %s143
      %s161 = sphi 0, %s161
      %s163 = sphi 0, %s161
      %s164 = sphi 0, %s163
      %s178 = sphi 0, %s164
      %s182 = sphi 0, %s182
      %s184 = sphi 0, %s182
      %s185 = sphi 0, %s184
      %s199 = sphi 0, %s185
      %s203 = sphi 0, %s203
      %s205 = sphi 0, %s203
      %s206 = sphi 0, %s205
      %s220 = sphi 0, %s206
      %s224 = sphi 0, %s224
      %s226 = sphi 0, %s224
      %s227 = sphi 0, %s226
      %s241 = sphi 0, %s227
      %s249 = sphi 0, %s251
      %s252 = sphi 0, %s249
      %s253 = sphi 0, %s252
      %s269 = sphi 0, %s253
    $region4: #{tpu_custom_call.1} parent=1 // loop_header_branch
      %27 = sbr.rel (%p25) target = $region8
    $region5: #{tpu_custom_call.1} parent=1 // loop_body
      %s29 = ssub.s32 %s24, 1
      %s30 = ssub.s32 %s24, 2
      %s37 = sadd.s32 1, %s32
      %p38 = scmp.ge.s32.totalorder %s37, 1
      %s39 = scalar_select %p38, 0, %s37
      %s40 = sadd.s32 1, %s31
      %s41 = scalar_select %p38, %s40, %s31
      %p42 = scmp.ge.s32.totalorder %s41, 2
      %s43 = scalar_select %p42, 0, %s41
      %s44 = ssub.s32 %s31, %s43
      %s45 = ssub.s32 %s32, %s39
      %s46 = sor.u32 %s44, %s45
      %p47 = scmp.eq.s32.totalorder %s46, 0
      %s49 = sadd.s32 %s48, 1
      %s50 = scalar_select %p47, %s48, %s49
      %p53 = pneg %p47
      %p54 = scmp.eq.s32.totalorder %s24, 1
      %p55 = por %p53, %p54
      %p56 = scmp.ne.s32.totalorder %s48, %s51
      %p57 = scmp.eq.s32.totalorder %s24, 0
      %p58 = por %p56, %p57
      %p59 = scmp.ne.s32.totalorder %s48, %s51
      %p60 = scmp.eq.s32.totalorder %s29, 1
      %p61 = por %p59, %p60
      %p62 = scmp.ne.s32.totalorder %s51, %s52
      %p63 = scmp.eq.s32.totalorder %s29, 0
      %p64 = por %p62, %p63
      %p65 = scmp.ne.s32.totalorder %s51, %s52
      %p66 = scmp.eq.s32.totalorder %s30, 1
      %p67 = por %p65, %p66
      %p69 = scmp.ne.s32.totalorder %s52, %s68
      %p70 = scmp.eq.s32.totalorder %s30, 0
      %p71 = por %p69, %p70
      %s72 = ssub.s32 %s31, %s43
      %p73 = scmp.eq.s32.totalorder %s72, 0
      %s75 = sadd.s32 %s74, 1
      %s76 = scalar_select %p73, %s74, %s75
      %p79 = pneg %p73
      %p80 = scmp.eq.s32.totalorder %s24, 1
      %p81 = por %p79, %p80
      %p82 = scmp.ne.s32.totalorder %s74, %s77
      %p83 = scmp.eq.s32.totalorder %s24, 0
      %p84 = por %p82, %p83
      %p85 = scmp.ne.s32.totalorder %s74, %s77
      %p86 = scmp.eq.s32.totalorder %s29, 1
      %p87 = por %p85, %p86
      %p88 = scmp.ne.s32.totalorder %s77, %s78
      %p89 = scmp.eq.s32.totalorder %s29, 0
      %p90 = por %p88, %p89
      %p91 = scmp.ne.s32.totalorder %s77, %s78
      %p92 = scmp.eq.s32.totalorder %s30, 1
      %p93 = por %p91, %p92
      %p95 = scmp.ne.s32.totalorder %s78, %s94
      %p96 = scmp.eq.s32.totalorder %s30, 0
      %p97 = por %p95, %p96
      %s99 = sadd.s32 %s98, 1
      %p102 = scmp.eq.s32.totalorder %s24, 1
      %p103 = scmp.ne.s32.totalorder %s98, %s100
      %p104 = scmp.eq.s32.totalorder %s24, 0
      %p105 = por %p103, %p104
      %p106 = scmp.ne.s32.totalorder %s98, %s100
      %p107 = scmp.eq.s32.totalorder %s29, 1
      %p108 = por %p106, %p107
      %p109 = scmp.ne.s32.totalorder %s100, %s101
      %p110 = scmp.eq.s32.totalorder %s29, 0
      %p111 = por %p109, %p110
      %p112 = scmp.ne.s32.totalorder %s100, %s101
      %p113 = scmp.eq.s32.totalorder %s30, 1
      %p114 = por %p112, %p113
      %p116 = scmp.ne.s32.totalorder %s101, %s115
      %p117 = scmp.eq.s32.totalorder %s30, 0
      %p118 = por %p116, %p117
      %s120 = sadd.s32 %s119, 1
      %p123 = scmp.eq.s32.totalorder %s24, 1
      %p124 = scmp.ne.s32.totalorder %s119, %s121
      %p125 = scmp.eq.s32.totalorder %s24, 0
      %p126 = por %p124, %p125
      %p127 = scmp.ne.s32.totalorder %s119, %s121
      %p128 = scmp.eq.s32.totalorder %s29, 1
      %p129 = por %p127, %p128
      %p130 = scmp.ne.s32.totalorder %s121, %s122
      %p131 = scmp.eq.s32.totalorder %s29, 0
      %p132 = por %p130, %p131
      %p133 = scmp.ne.s32.totalorder %s121, %s122
      %p134 = scmp.eq.s32.totalorder %s30, 1
      %p135 = por %p133, %p134
      %p137 = scmp.ne.s32.totalorder %s122, %s136
      %p138 = scmp.eq.s32.totalorder %s30, 0
      %p139 = por %p137, %p138
      %s141 = sadd.s32 %s140, 1
      %p144 = scmp.eq.s32.totalorder %s24, 1
      %p145 = scmp.ne.s32.totalorder %s140, %s142
      %p146 = scmp.eq.s32.totalorder %s24, 0
      %p147 = por %p145, %p146
      %p148 = scmp.ne.s32.totalorder %s140, %s142
      %p149 = scmp.eq.s32.totalorder %s29, 1
      %p150 = por %p148, %p149
      %p151 = scmp.ne.s32.totalorder %s142, %s143
      %p152 = scmp.eq.s32.totalorder %s29, 0
      %p153 = por %p151, %p152
      %p154 = scmp.ne.s32.totalorder %s142, %s143
      %p155 = scmp.eq.s32.totalorder %s30, 1
      %p156 = por %p154, %p155
      %p158 = scmp.ne.s32.totalorder %s143, %s157
      %p159 = scmp.eq.s32.totalorder %s30, 0
      %p160 = por %p158, %p159
      %s162 = sadd.s32 %s161, 1
      %p165 = scmp.eq.s32.totalorder %s24, 1
      %p166 = scmp.ne.s32.totalorder %s161, %s163
      %p167 = scmp.eq.s32.totalorder %s24, 0
      %p168 = por %p166, %p167
      %p169 = scmp.ne.s32.totalorder %s161, %s163
      %p170 = scmp.eq.s32.totalorder %s29, 1
      %p171 = por %p169, %p170
      %p172 = scmp.ne.s32.totalorder %s163, %s164
      %p173 = scmp.eq.s32.totalorder %s29, 0
      %p174 = por %p172, %p173
      %p175 = scmp.ne.s32.totalorder %s163, %s164
      %p176 = scmp.eq.s32.totalorder %s30, 1
      %p177 = por %p175, %p176
      %p179 = scmp.ne.s32.totalorder %s164, %s178
      %p180 = scmp.eq.s32.totalorder %s30, 0
      %p181 = por %p179, %p180
      %s183 = sadd.s32 %s182, 1
      %p186 = scmp.eq.s32.totalorder %s24, 1
      %p187 = scmp.ne.s32.totalorder %s182, %s184
      %p188 = scmp.eq.s32.totalorder %s24, 0
      %p189 = por %p187, %p188
      %p190 = scmp.ne.s32.totalorder %s182, %s184
      %p191 = scmp.eq.s32.totalorder %s29, 1
      %p192 = por %p190, %p191
      %p193 = scmp.ne.s32.totalorder %s184, %s185
      %p194 = scmp.eq.s32.totalorder %s29, 0
      %p195 = por %p193, %p194
      %p196 = scmp.ne.s32.totalorder %s184, %s185
      %p197 = scmp.eq.s32.totalorder %s30, 1
      %p198 = por %p196, %p197
      %p200 = scmp.ne.s32.totalorder %s185, %s199
      %p201 = scmp.eq.s32.totalorder %s30, 0
      %p202 = por %p200, %p201
      %s204 = sadd.s32 %s203, 1
      %p207 = scmp.eq.s32.totalorder %s24, 1
      %p208 = scmp.ne.s32.totalorder %s203, %s205
      %p209 = scmp.eq.s32.totalorder %s24, 0
      %p210 = por %p208, %p209
      %p211 = scmp.ne.s32.totalorder %s203, %s205
      %p212 = scmp.eq.s32.totalorder %s29, 1
      %p213 = por %p211, %p212
      %p214 = scmp.ne.s32.totalorder %s205, %s206
      %p215 = scmp.eq.s32.totalorder %s29, 0
      %p216 = por %p214, %p215
      %p217 = scmp.ne.s32.totalorder %s205, %s206
      %p218 = scmp.eq.s32.totalorder %s30, 1
      %p219 = por %p217, %p218
      %p221 = scmp.ne.s32.totalorder %s206, %s220
      %p222 = scmp.eq.s32.totalorder %s30, 0
      %p223 = por %p221, %p222
      %s225 = sadd.s32 %s224, 1
      %p228 = scmp.eq.s32.totalorder %s24, 1
      %p229 = scmp.ne.s32.totalorder %s224, %s226
      %p230 = scmp.eq.s32.totalorder %s24, 0
      %p231 = por %p229, %p230
      %p232 = scmp.ne.s32.totalorder %s224, %s226
      %p233 = scmp.eq.s32.totalorder %s29, 1
      %p234 = por %p232, %p233
      %p235 = scmp.ne.s32.totalorder %s226, %s227
      %p236 = scmp.eq.s32.totalorder %s29, 0
      %p237 = por %p235, %p236
      %p238 = scmp.ne.s32.totalorder %s226, %s227
      %p239 = scmp.eq.s32.totalorder %s30, 1
      %p240 = por %p238, %p239
      %p242 = scmp.ne.s32.totalorder %s227, %s241
      %p243 = scmp.eq.s32.totalorder %s30, 0
      %p244 = por %p242, %p243
      %s245 = ssub.s32 %s31, %s43
      %s246 = ssub.s32 %s32, %s39
      %s247 = sor.u32 %s245, %s246
      %p248 = scmp.eq.s32.totalorder %s247, 0
      %s250 = sadd.s32 %s249, 1
      %s251 = scalar_select %p248, %s249, %s250
      %p254 = pneg %p248
      %p255 = scmp.eq.s32.totalorder %s24, 1
      %p256 = por %p254, %p255
      %p257 = scmp.ne.s32.totalorder %s249, %s252
      %p258 = scmp.eq.s32.totalorder %s24, 0
      %p259 = por %p257, %p258
      %p260 = scmp.ne.s32.totalorder %s249, %s252
      %p261 = scmp.eq.s32.totalorder %s29, 1
      %p262 = por %p260, %p261
      %p263 = scmp.ne.s32.totalorder %s252, %s253
      %p264 = scmp.eq.s32.totalorder %s29, 0
      %p265 = por %p263, %p264
      %p266 = scmp.ne.s32.totalorder %s252, %s253
      %p267 = scmp.eq.s32.totalorder %s30, 1
      %p268 = por %p266, %p267
      %p270 = scmp.ne.s32.totalorder %s253, %s269
      %p271 = scmp.eq.s32.totalorder %s30, 0
      %p272 = por %p270, %p271
      %p273 = scmp.le.s32.totalorder 1, %s24
      %p274 = scmp.lt.s32.totalorder %s24, 3
      %p275 = pnand %p273, %p274
      %p276 = pneg %p275
      // Predicated region
      $region9: #{tpu_custom_call.1} parent=5 // pred_check
        _
      $region10: #{tpu_custom_call.1} parent=5 // pred_check_branch
        %278 = sbr.rel (%p275) target = $region12
      $region11: #{tpu_custom_call.1} parent=5 // pred_region
        %s279 = ssub.s32 %s24, 1
        // Predicated region
        $region13: #{tpu_custom_call.1} parent=11 // pred_check
          %p280 = pneg %p111
        $region14: #{tpu_custom_call.1} parent=11 // pred_check_branch
          %282 = sbr.rel (%p280) target = $region16
        $region15: #{tpu_custom_call.1} parent=11 // pred_region
          _
        $region16: #{tpu_custom_call.1} parent=11 // pred_fallthru
          _
        // Predicated region
        $region17: #{tpu_custom_call.1} parent=11 // pred_check
          %p283 = pneg %p132
        $region18: #{tpu_custom_call.1} parent=11 // pred_check_branch
          %285 = sbr.rel (%p283) target = $region20
        $region19: #{tpu_custom_call.1} parent=11 // pred_region
          %s287 = ssub.s32 512, 512
          %288 = vsyncadd [#allocation7], %s287
          %s289 = sshll.u32 [#allocation6], 4
          %s290 = int_to_ptr.vmem [resolvable:$true] %s289
          %295 = dma.hbm_to_vmem [thread:$0]  %s3, 512, %s290, [#allocation7], 128, 128, 8
        $region20: #{tpu_custom_call.1} parent=11 // pred_fallthru
          _
        // Predicated region
        $region21: #{tpu_custom_call.1} parent=11 // pred_check
          %p296 = pneg %p153
        $region22: #{tpu_custom_call.1} parent=11 // pred_check_branch
          %298 = sbr.rel (%p296) target = $region24
        $region23: #{tpu_custom_call.1} parent=11 // pred_region
          _
        $region24: #{tpu_custom_call.1} parent=11 // pred_fallthru
          _
        // Predicated region
        $region25: #{tpu_custom_call.1} parent=11 // pred_check
          %p299 = pneg %p174
        $region26: #{tpu_custom_call.1} parent=11 // pred_check_branch
          %301 = sbr.rel (%p299) target = $region28
        $region27: #{tpu_custom_call.1} parent=11 // pred_region
          _
        $region28: #{tpu_custom_call.1} parent=11 // pred_fallthru
          _
        // Predicated region
        $region29: #{tpu_custom_call.1} parent=11 // pred_check
          %p302 = pneg %p195
        $region30: #{tpu_custom_call.1} parent=11 // pred_check_branch
          %304 = sbr.rel (%p302) target = $region32
        $region31: #{tpu_custom_call.1} parent=11 // pred_region
          _
        $region32: #{tpu_custom_call.1} parent=11 // pred_fallthru
          _
        // Predicated region
        $region33: #{tpu_custom_call.1} parent=11 // pred_check
          %p305 = pneg %p216
        $region34: #{tpu_custom_call.1} parent=11 // pred_check_branch
          %307 = sbr.rel (%p305) target = $region36
        $region35: #{tpu_custom_call.1} parent=11 // pred_region
          _
        $region36: #{tpu_custom_call.1} parent=11 // pred_fallthru
          _
        // Predicated region
        $region37: #{tpu_custom_call.1} parent=11 // pred_check
          %p308 = pneg %p237
        $region38: #{tpu_custom_call.1} parent=11 // pred_check_branch
          %310 = sbr.rel (%p308) target = $region40
        $region39: #{tpu_custom_call.1} parent=11 // pred_region
          _
        $region40: #{tpu_custom_call.1} parent=11 // pred_fallthru
          _
      $region12: #{tpu_custom_call.1} parent=5 // pred_fallthru
        _
      %p311 = scmp.lt.s32.totalorder %s24, 2
      // Predicated region
      $region41: #{tpu_custom_call.1} parent=5 // pred_check
        %p312 = pneg %p311
      $region42: #{tpu_custom_call.1} parent=5 // pred_check_branch
        %314 = sbr.rel (%p312) target = $region44
      $region43: #{tpu_custom_call.1} parent=5 // pred_region
        // Predicated region
        $region45: #{tpu_custom_call.1} parent=43 // pred_check
          %p315 = pneg %p58
        $region46: #{tpu_custom_call.1} parent=43 // pred_check_branch
          %317 = sbr.rel (%p315) target = $region48
        $region47: #{tpu_custom_call.1} parent=43 // pred_region
          %p318 = scmp.lt.s32.totalorder %s31, 1
          %s319 = scalar_select %p318, %s31, 1
          %p320 = scmp.lt.s32.totalorder %s32, 0
          %s321 = scalar_select %p320, %s32, 0
          %s322 = sadd.s32 %s321, %s319
          %s323 = smul.addr %s322, 8
          %s324 = scalar_lea.vmem %s0, %s323
        $region48: #{tpu_custom_call.1} parent=43 // pred_fallthru
          _
        // Predicated region
        $region49: #{tpu_custom_call.1} parent=43 // pred_check
          %p325 = pneg %p84
        $region50: #{tpu_custom_call.1} parent=43 // pred_check_branch
          %327 = sbr.rel (%p325) target = $region52
        $region51: #{tpu_custom_call.1} parent=43 // pred_region
          %s328 = sand.u32 %s74, 1
          %s329 = scalar_lea.sflag [#allocation4], %s328
          %s330 = sand.u32 %s74, 1
          %s331 = smul.addr %s330, 8
          %s332 = scalar_lea.vmem [#allocation3], %s331
          %s334 = ssub.s32 128, 128
          %335 = vsyncadd %s329, %s334
          %s336 = smul.addr %s31, 128
          %s337 = scalar_lea.hbm %s1, %s336
          %s339 = sshll.u32 %s332, 4
          %s340 = int_to_ptr.vmem [resolvable:$true] %s339
          %342 = dma.hbm_to_vmem [thread:$0]  %s337, 128, %s340, %s329
        $region52: #{tpu_custom_call.1} parent=43 // pred_fallthru
          _
      $region44: #{tpu_custom_call.1} parent=5 // pred_fallthru
        _
      %p343 = scmp.le.s32.totalorder 1, %s24
      %p344 = scmp.lt.s32.totalorder %s24, 3
      %p345 = pnand %p343, %p344
      %p346 = pneg %p345
      // Predicated region
      $region53: #{tpu_custom_call.1} parent=5 // pred_check
        _
      $region54: #{tpu_custom_call.1} parent=5 // pred_check_branch
        %348 = sbr.rel (%p345) target = $region56
      $region55: #{tpu_custom_call.1} parent=5 // pred_region
        %s349 = ssub.s32 %s24, 1
        %s350 = sand.u32 %s77, 1
        %s351 = scalar_lea.sflag [#allocation4], %s350
        %s352 = sand.u32 %s77, 1
        %s353 = smul.addr %s352, 8
        %s354 = scalar_lea.vmem [#allocation3], %s353
        // Predicated region
        $region57: #{tpu_custom_call.1} parent=55 // pred_check
          %p355 = pneg %p90
        $region58: #{tpu_custom_call.1} parent=55 // pred_check_branch
          %357 = sbr.rel (%p355) target = $region60
        $region59: #{tpu_custom_call.1} parent=55 // pred_region
          %358 = dma.done %s351, 128
        $region60: #{tpu_custom_call.1} parent=55 // pred_fallthru
          _
        // Predicated region
        $region61: #{tpu_custom_call.1} parent=55 // pred_check
          %p359 = pneg %p132
        $region62: #{tpu_custom_call.1} parent=55 // pred_check_branch
          %361 = sbr.rel (%p359) target = $region64
        $region63: #{tpu_custom_call.1} parent=55 // pred_region
          %362 = dma.done [#allocation7], 512
        $region64: #{tpu_custom_call.1} parent=55 // pred_fallthru
          _
        %p363 = scmp.lt.s32.totalorder %s33, 1
        %s364 = scalar_select %p363, %s33, 1
        %p365 = scmp.lt.s32.totalorder %s34, 0
        %s366 = scalar_select %p365, %s34, 0
        %s367 = sadd.s32 %s366, %s364
        %s368 = smul.addr %s367, 8
        %s369 = scalar_lea.vmem %s0, %s368
        %p370 = pneg %p64
        %p371 = pneg %p61
        %s372 = sand.u32 %s77, 1
        %s373 = scalar_lea.sflag [#allocation4], %s372
        %s374 = sand.u32 %s77, 1
        %s375 = smul.addr %s374, 8
        %s376 = scalar_lea.vmem [#allocation3], %s375
        %p377 = pneg %p90
        %p378 = pneg %p87
        %p379 = pneg %p111
        %p380 = pneg %p108
        %p381 = pneg %p132
        %p382 = pneg %p129
        %p383 = pneg %p153
        %p384 = pneg %p150
        %p385 = pneg %p174
        %p386 = pneg %p171
        %p387 = pneg %p195
        %p388 = pneg %p192
        %p389 = pneg %p216
        %p390 = pneg %p213
        %p391 = pneg %p237
        %p392 = pneg %p234
        %p393 = pneg %p265
        %p394 = pneg %p262
        %s395 = sand.u32 %s252, 1
        %s396 = scalar_lea.sflag [#allocation5], %s395
        %s397 = sand.u32 %s252, 1
        %s398 = smul.addr %s397, 8
        %s399 = scalar_lea.vmem [#allocation8], %s398
        %p400 = scmp.lt.s32.totalorder %s33, 1
        %s401 = scalar_select %p400, %s33, 1
        %p402 = scmp.lt.s32.totalorder %s34, 0
        %s403 = scalar_select %p402, %s34, 0
        %s404 = sadd.s32 %s403, %s401
        %s405 = smul.addr %s404, 8
        %s406 = scalar_lea.vmem %s0, %s405
        %v407 = vld [vmem:[%s406] sm:$0xff]
        %v408 = vld [vmem:[%s354] sm:$0xff]
        %v409 = vld [vmem:[%s2] sm:$0xff]
        %v410 = vld [vmem:[%s2 + $0x8] sm:$0xff]
        %v411 = vld [vmem:[%s2 + $0x10] sm:$0xff]
        %v412 = vld [vmem:[%s2 + $0x18] sm:$0xff]
        %vm413 = vcmask 261120
        %v415 = vsel %vm413, %v407, 0
        %417 = vmatprep.subr.mxu0 0.0
        %418 = vmatpush1.msra.mxu0 0.0
        %419 = vmatprep.subr.mxu0 0.0
        %420 = vmatpush1.msra.mxu0 0.0
        %421 = vmatprep.subr.mxu0 0.0
        %422 = vmatpush1.msra.mxu0 0.0
        %423 = vmatprep.subr.mxu0 0.0
        %424 = vmatpush1.msra.mxu0 0.0
        %425 = vmatprep.subr.mxu0 0.0
        %426 = vmatpush1.msra.mxu0 0.0
        %427 = vmatprep.subr.mxu0 0.0
        %428 = vmatpush1.msra.mxu0 0.0
        %429 = vmatprep.subr.mxu0 0.0
        %430 = vmatpush1.msra.mxu0 0.0
        %431 = vmatprep.subr.mxu0 0.0
        %432 = vmatpush1.msra.mxu0 0.0
        %433 = vmatprep.subr.mxu0 0.0
        %434 = vmatpush1.msra.mxu0 0.0
        %435 = vmatprep.subr.mxu0 0.0
        %436 = vmatpush1.msra.mxu0 0.0
        %437 = vmatprep.subr.mxu0 0.0
        %438 = vmatpush1.msra.mxu0 0.0
        %439 = vmatprep.subr.mxu0 0.0
        %440 = vmatpush1.msra.mxu0 0.0
        %441 = vmatprep.subr.mxu0 0.0
        %442 = vmatpush1.msra.mxu0 %v412
        %443 = vmatprep.subr.mxu0 0.0
        %444 = vmatpush1.msra.mxu0 %v411
        %445 = vmatprep.subr.mxu0 0.0
        %446 = vmatpush1.msra.mxu0 %v410
        %447 = vmatprep.subr.mxu0 0.0
        %448 = vmatpush1.msra.mxu0 %v409
        %449 = vmatprep.subr.mxu0 0.0
        %450 = vmatpush2.msra.mxu0 0.0
        %451 = vmatprep.subr.mxu0 0.0
        %452 = vmatpush2.msra.mxu0 0.0
        %453 = vmatprep.subr.mxu0 0.0
        %454 = vmatpush2.msra.mxu0 0.0
        %455 = vmatprep.subr.mxu0 0.0
        %456 = vmatpush2.msra.mxu0 0.0
        %457 = vmatprep.subr.mxu0 0.0
        %458 = vmatpush2.msra.mxu0 0.0
        %459 = vmatprep.subr.mxu0 0.0
        %460 = vmatpush2.msra.mxu0 0.0
        %461 = vmatprep.subr.mxu0 0.0
        %462 = vmatpush2.msra.mxu0 0.0
        %463 = vmatprep.subr.mxu0 0.0
        %464 = vmatpush2.msra.mxu0 0.0
        %465 = vmatprep.subr.mxu0 0.0
        %466 = vmatpush2.msra.mxu0 0.0
        %467 = vmatprep.subr.mxu0 0.0
        %468 = vmatpush2.msra.mxu0 0.0
        %469 = vmatprep.subr.mxu0 0.0
        %470 = vmatpush2.msra.mxu0 0.0
        %471 = vmatprep.subr.mxu0 0.0
        %472 = vmatpush2.msra.mxu0 0.0
        %473 = vmatprep.subr.mxu0 0.0
        %474 = vmatpush2.msra.mxu0 0.0
        %475 = vmatprep.subr.mxu0 0.0
        %476 = vmatpush2.msra.mxu0 0.0
        %477 = vmatprep.subr.mxu0 0.0
        %478 = vmatpush2.msra.mxu0 0.0
        %479 = vmatprep.subr.mxu0 0.0
        %480 = vmatpush2.msra.mxu0 0.0
        %481 = vmatprep.mubr.f32.mxu0 0.0
        %482 = vmatmul.mubr.f32.gmra.mxu0 %v415
        %v483 = vpop.f32.mrf.mxu0
        %v484 = vadd.f32 0.0, %v483
        %v485 = vpop.f32.mrf.mxu0
        %486 = vdwg.mxu0
        %v487 = vld [vmem:[#allocation6] sm:$0xff]
        %v488 = vld [vmem:[#allocation6 + $0x8] sm:$0xff]
        %v489 = vld [vmem:[#allocation6 + $0x10] sm:$0xff]
        %v490 = vld [vmem:[#allocation6 + $0x18] sm:$0xff]
        %v492 = vsel %vm413, %v408, 0
        %494 = vmatprep.subr.mxu0 0.0
        %495 = vmatpush1.msra.mxu0 0.0
        %496 = vmatprep.subr.mxu0 0.0
        %497 = vmatpush1.msra.mxu0 0.0
        %498 = vmatprep.subr.mxu0 0.0
        %499 = vmatpush1.msra.mxu0 0.0
        %500 = vmatprep.subr.mxu0 0.0
        %501 = vmatpush1.msra.mxu0 0.0
        %502 = vmatprep.subr.mxu0 0.0
        %503 = vmatpush1.msra.mxu0 0.0
        %504 = vmatprep.subr.mxu0 0.0
        %505 = vmatpush1.msra.mxu0 0.0
        %506 = vmatprep.subr.mxu0 0.0
        %507 = vmatpush1.msra.mxu0 0.0
        %508 = vmatprep.subr.mxu0 0.0
        %509 = vmatpush1.msra.mxu0 0.0
        %510 = vmatprep.subr.mxu0 0.0
        %511 = vmatpush1.msra.mxu0 0.0
        %512 = vmatprep.subr.mxu0 0.0
        %513 = vmatpush1.msra.mxu0 0.0
        %514 = vmatprep.subr.mxu0 0.0
        %515 = vmatpush1.msra.mxu0 0.0
        %516 = vmatprep.subr.mxu0 0.0
        %517 = vmatpush1.msra.mxu0 0.0
        %518 = vmatprep.subr.mxu0 0.0
        %519 = vmatpush1.msra.mxu0 %v490
        %520 = vmatprep.subr.mxu0 0.0
        %521 = vmatpush1.msra.mxu0 %v489
        %522 = vmatprep.subr.mxu0 0.0
        %523 = vmatpush1.msra.mxu0 %v488
        %524 = vmatprep.subr.mxu0 0.0
        %525 = vmatpush1.msra.mxu0 %v487
        %526 = vmatprep.subr.mxu0 0.0
        %527 = vmatpush2.msra.mxu0 0.0
        %528 = vmatprep.subr.mxu0 0.0
        %529 = vmatpush2.msra.mxu0 0.0
        %530 = vmatprep.subr.mxu0 0.0
        %531 = vmatpush2.msra.mxu0 0.0
        %532 = vmatprep.subr.mxu0 0.0
        %533 = vmatpush2.msra.mxu0 0.0
        %534 = vmatprep.subr.mxu0 0.0
        %535 = vmatpush2.msra.mxu0 0.0
        %536 = vmatprep.subr.mxu0 0.0
        %537 = vmatpush2.msra.mxu0 0.0
        %538 = vmatprep.subr.mxu0 0.0
        %539 = vmatpush2.msra.mxu0 0.0
        %540 = vmatprep.subr.mxu0 0.0
        %541 = vmatpush2.msra.mxu0 0.0
        %542 = vmatprep.subr.mxu0 0.0
        %543 = vmatpush2.msra.mxu0 0.0
        %544 = vmatprep.subr.mxu0 0.0
        %545 = vmatpush2.msra.mxu0 0.0
        %546 = vmatprep.subr.mxu0 0.0
        %547 = vmatpush2.msra.mxu0 0.0
        %548 = vmatprep.subr.mxu0 0.0
        %549 = vmatpush2.msra.mxu0 0.0
        %550 = vmatprep.subr.mxu0 0.0
        %551 = vmatpush2.msra.mxu0 0.0
        %552 = vmatprep.subr.mxu0 0.0
        %553 = vmatpush2.msra.mxu0 0.0
        %554 = vmatprep.subr.mxu0 0.0
        %555 = vmatpush2.msra.mxu0 0.0
        %556 = vmatprep.subr.mxu0 0.0
        %557 = vmatpush2.msra.mxu0 0.0
        %558 = vmatprep.mubr.f32.mxu0 0.0
        %559 = vmatmul.mubr.f32.gmra.mxu0 %v492
        %v560 = vpop.f32.mrf.mxu0
        %v561 = vadd.f32 0.0, %v560
        %v562 = vpop.f32.mrf.mxu0
        %563 = vdwg.mxu0
        %v565 = vcombine.high %v484, %v484
        %v567 = vunpack.c.l.s4 1966171168
        %v568 = vunpack.c.0.s8 %v567
        %v569 = vlaneseq
        %v570 = vshrl.u32 %v569, 7
        %v571 = vsub.s32 %v568, %v570
        %v572 = vrot.slane %v484, %v571
        %v574 = vunpack.c.l.s4 1966171168
        %v575 = vunpack.c.0.s8 %v574
        %v576 = vlaneseq
        %v577 = vshrl.u32 %v576, 7
        %v578 = vsub.s32 %v575, %v577
        %v579 = vrot.slane %v565, %v578
        %v580 = vcombine.high %v572, %v572
        %v581 = vcombine.high %v579, %v579
        %v583 = vunpack.c.l.s4 1966171168
        %v584 = vunpack.c.0.s8 %v583
        %v585 = vlaneseq
        %v586 = vshrl.u32 %v585, 7
        %v587 = vsub.s32 %v584, %v586
        %v588 = vrot.slane %v572, %v587
        %v590 = vunpack.c.l.s4 1966171168
        %v591 = vunpack.c.0.s8 %v590
        %v592 = vlaneseq
        %v593 = vshrl.u32 %v592, 7
        %v594 = vsub.s32 %v591, %v593
        %v595 = vrot.slane %v579, %v594
        %v597 = vunpack.c.l.s4 1966171168
        %v598 = vunpack.c.0.s8 %v597
        %v599 = vlaneseq
        %v600 = vshrl.u32 %v599, 7
        %v601 = vsub.s32 %v598, %v600
        %v602 = vrot.slane %v580, %v601
        %v604 = vunpack.c.l.s4 1966171168
        %v605 = vunpack.c.0.s8 %v604
        %v606 = vlaneseq
        %v607 = vshrl.u32 %v606, 7
        %v608 = vsub.s32 %v605, %v607
        %v609 = vrot.slane %v581, %v608
        %v610 = vcombine.high %v588, %v588
        %v611 = vcombine.high %v595, %v595
        %v612 = vcombine.high %v602, %v602
        %v613 = vcombine.high %v609, %v609
        %v614 = vlaneseq
        %v615 = vshrl.u32 %v614, 7
        %v616 = vsub.s32 0, %v615
        %v617 = vrot.slane %v588, %v616
        %v618 = vlaneseq
        %v619 = vshrl.u32 %v618, 7
        %v620 = vsub.s32 0, %v619
        %v621 = vrot.slane %v602, %v620
        %v622 = vlaneseq
        %v623 = vshrl.u32 %v622, 7
        %v624 = vsub.s32 0, %v623
        %v625 = vrot.slane %v610, %v624
        %v626 = vlaneseq
        %v627 = vshrl.u32 %v626, 7
        %v628 = vsub.s32 0, %v627
        %v629 = vrot.slane %v612, %v628
        %v630 = vlaneseq
        %v631 = vshrl.u32 %v630, 7
        %v632 = vsub.s32 0, %v631
        %v633 = vrot.slane %v595, %v632
        %v634 = vlaneseq
        %v635 = vshrl.u32 %v634, 7
        %v636 = vsub.s32 0, %v635
        %v637 = vrot.slane %v609, %v636
        %v638 = vlaneseq
        %v639 = vshrl.u32 %v638, 7
        %v640 = vsub.s32 0, %v639
        %v641 = vrot.slane %v611, %v640
        %v642 = vlaneseq
        %v643 = vshrl.u32 %v642, 7
        %v644 = vsub.s32 0, %v643
        %v645 = vrot.slane %v613, %v644
        %v654 = vadd.f32 %v617, %v561
        %v655 = vadd.f32 %v621, %v561
        %v656 = vadd.f32 %v625, %v561
        %v657 = vadd.f32 %v629, %v561
        %v658 = vadd.f32 %v633, %v561
        %v659 = vadd.f32 %v637, %v561
        %v660 = vadd.f32 %v641, %v561
        %v661 = vadd.f32 %v645, %v561
        %v662 = vld [vmem:[%s4] sm:$0x1]
        %v664 = vlaneseq
        %v665 = vshrl.u32 %v664, 7
        %v666 = vsub.s32 0, %v665
        %v667 = vrot.slane %v662, %v666
        %v669 = vadd.f32 %v654, %v667
        %v670 = vadd.f32 %v655, %v667
        %v671 = vadd.f32 %v656, %v667
        %v672 = vadd.f32 %v657, %v667
        %v673 = vadd.f32 %v658, %v667
        %v674 = vadd.f32 %v659, %v667
        %v675 = vadd.f32 %v660, %v667
        %v676 = vadd.f32 %v661, %v667
        %vm677 = vcmp.gt.f32.partialorder %v669, 0.0
        %vm678 = vcmp.gt.f32.partialorder %v670, 0.0
        %vm679 = vcmp.gt.f32.partialorder %v671, 0.0
        %vm680 = vcmp.gt.f32.partialorder %v672, 0.0
        %vm681 = vcmp.gt.f32.partialorder %v673, 0.0
        %vm682 = vcmp.gt.f32.partialorder %v674, 0.0
        %vm683 = vcmp.gt.f32.partialorder %v675, 0.0
        %vm684 = vcmp.gt.f32.partialorder %v676, 0.0
        %v685 = vmul.f32 %v669, 0.01
        %v686 = vmul.f32 %v670, 0.01
        %v687 = vmul.f32 %v671, 0.01
        %v688 = vmul.f32 %v672, 0.01
        %v689 = vmul.f32 %v673, 0.01
        %v690 = vmul.f32 %v674, 0.01
        %v691 = vmul.f32 %v675, 0.01
        %v692 = vmul.f32 %v676, 0.01
        %v693 = vsel %vm677, %v669, %v685
        %v694 = vsel %vm678, %v670, %v686
        %v695 = vsel %vm679, %v671, %v687
        %v696 = vsel %vm680, %v672, %v688
        %v697 = vsel %vm681, %v673, %v689
        %v698 = vsel %vm682, %v674, %v690
        %v699 = vsel %vm683, %v675, %v691
        %v700 = vsel %vm684, %v676, %v692
        %v701 = vld [vmem:[%s5] sm:$0xff]
        %v702 = vld [vmem:[%s5 + $0x8] sm:$0xff]
        %v703 = vld [vmem:[%s5 + $0x10] sm:$0xff]
        %v704 = vld [vmem:[%s5 + $0x18] sm:$0xff]
        %v705 = vld [vmem:[%s6] sm:$0x1]
        %v707 = vlaneseq
        %v708 = vshrl.u32 %v707, 7
        %v709 = vsub.s32 0, %v708
        %v710 = vrot.slane %v705, %v709
        %v713 = vsel %vm413, %v693, 0
        %v716 = vsel %vm413, %v694, 0
        %v719 = vsel %vm413, %v695, 0
        %v722 = vsel %vm413, %v696, 0
        %v725 = vsel %vm413, %v697, 0
        %v728 = vsel %vm413, %v698, 0
        %v731 = vsel %vm413, %v699, 0
        %v734 = vsel %vm413, %v700, 0
        %736 = vmatprep.subr.mxu0 0.0
        %737 = vmatpush1.msra.mxu0 0.0
        %738 = vmatprep.subr.mxu0 0.0
        %739 = vmatpush1.msra.mxu0 0.0
        %740 = vmatprep.subr.mxu0 0.0
        %741 = vmatpush1.msra.mxu0 0.0
        %742 = vmatprep.subr.mxu0 0.0
        %743 = vmatpush1.msra.mxu0 0.0
        %744 = vmatprep.subr.mxu0 0.0
        %745 = vmatpush1.msra.mxu0 0.0
        %746 = vmatprep.subr.mxu0 0.0
        %747 = vmatpush1.msra.mxu0 0.0
        %748 = vmatprep.subr.mxu0 0.0
        %749 = vmatpush1.msra.mxu0 0.0
        %750 = vmatprep.subr.mxu0 0.0
        %751 = vmatpush1.msra.mxu0 0.0
        %752 = vmatprep.subr.mxu0 0.0
        %753 = vmatpush1.msra.mxu0 0.0
        %754 = vmatprep.subr.mxu0 0.0
        %755 = vmatpush1.msra.mxu0 0.0
        %756 = vmatprep.subr.mxu0 0.0
        %757 = vmatpush1.msra.mxu0 0.0
        %758 = vmatprep.subr.mxu0 0.0
        %759 = vmatpush1.msra.mxu0 0.0
        %760 = vmatprep.subr.mxu0 0.0
        %761 = vmatpush1.msra.mxu0 %v704
        %762 = vmatprep.subr.mxu0 0.0
        %763 = vmatpush1.msra.mxu0 %v703
        %764 = vmatprep.subr.mxu0 0.0
        %765 = vmatpush1.msra.mxu0 %v702
        %766 = vmatprep.subr.mxu0 0.0
        %767 = vmatpush1.msra.mxu0 %v701
        %768 = vmatprep.subr.mxu0 0.0
        %769 = vmatpush2.msra.mxu0 0.0
        %770 = vmatprep.subr.mxu0 0.0
        %771 = vmatpush2.msra.mxu0 0.0
        %772 = vmatprep.subr.mxu0 0.0
        %773 = vmatpush2.msra.mxu0 0.0
        %774 = vmatprep.subr.mxu0 0.0
        %775 = vmatpush2.msra.mxu0 0.0
        %776 = vmatprep.subr.mxu0 0.0
        %777 = vmatpush2.msra.mxu0 0.0
        %778 = vmatprep.subr.mxu0 0.0
        %779 = vmatpush2.msra.mxu0 0.0
        %780 = vmatprep.subr.mxu0 0.0
        %781 = vmatpush2.msra.mxu0 0.0
        %782 = vmatprep.subr.mxu0 0.0
        %783 = vmatpush2.msra.mxu0 0.0
        %784 = vmatprep.subr.mxu0 0.0
        %785 = vmatpush2.msra.mxu0 0.0
        %786 = vmatprep.subr.mxu0 0.0
        %787 = vmatpush2.msra.mxu0 0.0
        %788 = vmatprep.subr.mxu0 0.0
        %789 = vmatpush2.msra.mxu0 0.0
        %790 = vmatprep.subr.mxu0 0.0
        %791 = vmatpush2.msra.mxu0 0.0
        %792 = vmatprep.subr.mxu0 0.0
        %793 = vmatpush2.msra.mxu0 0.0
        %794 = vmatprep.subr.mxu0 0.0
        %795 = vmatpush2.msra.mxu0 0.0
        %796 = vmatprep.subr.mxu0 0.0
        %797 = vmatpush2.msra.mxu0 0.0
        %798 = vmatprep.subr.mxu0 0.0
        %799 = vmatpush2.msra.mxu0 0.0
        %800 = vmatprep.mubr.f32.mxu0 0.0
        %801 = vmatmul.mubr.f32.gmra.mxu0 %v713
        %v802 = vpop.f32.mrf.mxu0
        %v803 = vadd.f32 %v710, %v802
        %v804 = vpop.f32.mrf.mxu0
        %805 = vmatprep.mubr.f32.mxu0 0.0
        %806 = vmatmul.mubr.f32.gmra.mxu0 %v716
        %v807 = vpop.f32.mrf.mxu0
        %v808 = vadd.f32 %v710, %v807
        %v809 = vpop.f32.mrf.mxu0
        %810 = vmatprep.mubr.f32.mxu0 0.0
        %811 = vmatmul.mubr.f32.gmra.mxu0 %v719
        %v812 = vpop.f32.mrf.mxu0
        %v813 = vadd.f32 %v710, %v812
        %v814 = vpop.f32.mrf.mxu0
        %815 = vmatprep.mubr.f32.mxu0 0.0
        %816 = vmatmul.mubr.f32.gmra.mxu0 %v722
        %v817 = vpop.f32.mrf.mxu0
        %v818 = vadd.f32 %v710, %v817
        %v819 = vpop.f32.mrf.mxu0
        %820 = vmatprep.mubr.f32.mxu0 0.0
        %821 = vmatmul.mubr.f32.gmra.mxu0 %v725
        %v822 = vpop.f32.mrf.mxu0
        %v823 = vadd.f32 %v710, %v822
        %v824 = vpop.f32.mrf.mxu0
        %825 = vmatprep.mubr.f32.mxu0 0.0
        %826 = vmatmul.mubr.f32.gmra.mxu0 %v728
        %v827 = vpop.f32.mrf.mxu0
        %v828 = vadd.f32 %v710, %v827
        %v829 = vpop.f32.mrf.mxu0
        %830 = vmatprep.mubr.f32.mxu0 0.0
        %831 = vmatmul.mubr.f32.gmra.mxu0 %v731
        %v832 = vpop.f32.mrf.mxu0
        %v833 = vadd.f32 %v710, %v832
        %v834 = vpop.f32.mrf.mxu0
        %835 = vmatprep.mubr.f32.mxu0 0.0
        %836 = vmatmul.mubr.f32.gmra.mxu0 %v734
        %v837 = vpop.f32.mrf.mxu0
        %v838 = vadd.f32 %v710, %v837
        %v839 = vpop.f32.mrf.mxu0
        %840 = vdwg.mxu0
        %vm841 = vcmp.gt.f32.partialorder %v803, 0.0
        %vm842 = vcmp.gt.f32.partialorder %v808, 0.0
        %vm843 = vcmp.gt.f32.partialorder %v813, 0.0
        %vm844 = vcmp.gt.f32.partialorder %v818, 0.0
        %vm845 = vcmp.gt.f32.partialorder %v823, 0.0
        %vm846 = vcmp.gt.f32.partialorder %v828, 0.0
        %vm847 = vcmp.gt.f32.partialorder %v833, 0.0
        %vm848 = vcmp.gt.f32.partialorder %v838, 0.0
        %v849 = vmul.f32 %v803, 0.01
        %v850 = vmul.f32 %v808, 0.01
        %v851 = vmul.f32 %v813, 0.01
        %v852 = vmul.f32 %v818, 0.01
        %v853 = vmul.f32 %v823, 0.01
        %v854 = vmul.f32 %v828, 0.01
        %v855 = vmul.f32 %v833, 0.01
        %v856 = vmul.f32 %v838, 0.01
        %v857 = vsel %vm841, %v803, %v849
        %v858 = vsel %vm842, %v808, %v850
        %v859 = vsel %vm843, %v813, %v851
        %v860 = vsel %vm844, %v818, %v852
        %v861 = vsel %vm845, %v823, %v853
        %v862 = vsel %vm846, %v828, %v854
        %v863 = vsel %vm847, %v833, %v855
        %v864 = vsel %vm848, %v838, %v856
        %v865 = vld [vmem:[%s7] sm:$0x1]
        %v867 = vlaneseq
        %v868 = vshrl.u32 %v867, 7
        %v869 = vsub.s32 0, %v868
        %v870 = vrot.slane %v865, %v869
        %v872 = vmul.f32 %v857, %v870
        %v873 = vmul.f32 %v858, %v870
        %v874 = vmul.f32 %v859, %v870
        %v875 = vmul.f32 %v860, %v870
        %v876 = vmul.f32 %v861, %v870
        %v877 = vmul.f32 %v862, %v870
        %v878 = vmul.f32 %v863, %v870
        %v879 = vmul.f32 %v864, %v870
        %vm880 = vcmask 130048
        %v881 = vsel %vm880, %v872, 0.0
        %882 = vadd.xlane.f32.xlu0 %v881
        %v883 = vpop.xlane.xlu0 %882
        %v884 = vsel %vm880, %v873, 0.0
        %885 = vadd.xlane.f32.xlu0 %v884
        %v886 = vpop.xlane.xlu0 %885
        %v887 = vsel %vm880, %v874, 0.0
        %888 = vadd.xlane.f32.xlu0 %v887
        %v889 = vpop.xlane.xlu0 %888
        %v890 = vsel %vm880, %v875, 0.0
        %891 = vadd.xlane.f32.xlu0 %v890
        %v892 = vpop.xlane.xlu0 %891
        %v893 = vsel %vm880, %v876, 0.0
        %894 = vadd.xlane.f32.xlu0 %v893
        %v895 = vpop.xlane.xlu0 %894
        %v896 = vsel %vm880, %v877, 0.0
        %897 = vadd.xlane.f32.xlu0 %v896
        %v898 = vpop.xlane.xlu0 %897
        %v899 = vsel %vm880, %v878, 0.0
        %900 = vadd.xlane.f32.xlu0 %v899
        %v901 = vpop.xlane.xlu0 %900
        %v902 = vsel %vm880, %v879, 0.0
        %903 = vadd.xlane.f32.xlu0 %v902
        %v904 = vpop.xlane.xlu0 %903
        %v905 = vld [vmem:[#allocation2] sm:$0x1]
        %v907 = vlaneseq
        %v908 = vshrl.u32 %v907, 7
        %v909 = vsub.s32 0, %v908
        %v910 = vrot.slane %v905, %v909
        %911 = vset.pattern.permute.xlu0 0
        %912 = vperm.xlu0 %911, %v910
        %v913 = vpop.permute.xlu0 %912
        %v915 = vadd.f32 %v883, %v913
        %v916 = vadd.f32 %v886, %v913
        %v917 = vadd.f32 %v889, %v913
        %v918 = vadd.f32 %v892, %v913
        %v919 = vadd.f32 %v895, %v913
        %v920 = vadd.f32 %v898, %v913
        %v921 = vadd.f32 %v901, %v913
        %v922 = vadd.f32 %v904, %v913
        %v931 = vlaneseq
        %v932 = vand.u32 %v931, 127
        %v933 = vlaneseq
        %v934 = vshrl.u32 %v933, 7
        %v935 = vsub.s32 %v932, %v934
        %v936 = vrot.slane %v915, %v935
        %v937 = vlaneseq
        %v938 = vshrl.u32 %v937, 7
        %v939 = vsub.s32 %v932, %v938
        %v940 = vrot.slane %v916, %v939
        %v941 = vlaneseq
        %v942 = vshrl.u32 %v941, 7
        %v943 = vsub.s32 %v932, %v942
        %v944 = vrot.slane %v917, %v943
        %v945 = vlaneseq
        %v946 = vshrl.u32 %v945, 7
        %v947 = vsub.s32 %v932, %v946
        %v948 = vrot.slane %v918, %v947
        %v949 = vlaneseq
        %v950 = vshrl.u32 %v949, 7
        %v951 = vsub.s32 %v932, %v950
        %v952 = vrot.slane %v919, %v951
        %v953 = vlaneseq
        %v954 = vshrl.u32 %v953, 7
        %v955 = vsub.s32 %v932, %v954
        %v956 = vrot.slane %v920, %v955
        %v957 = vlaneseq
        %v958 = vshrl.u32 %v957, 7
        %v959 = vsub.s32 %v932, %v958
        %v960 = vrot.slane %v921, %v959
        %v961 = vlaneseq
        %v962 = vshrl.u32 %v961, 7
        %v963 = vsub.s32 %v932, %v962
        %v964 = vrot.slane %v922, %v963
        %vm965 = vcmask 1041409
        %v966 = vsel %vm965, %v940, %v936
        %vm967 = vcmask 1042434
        %v968 = vsel %vm967, %v944, %v966
        %vm969 = vcmask 1043459
        %v970 = vsel %vm969, %v948, %v968
        %vm971 = vcmask 1044484
        %v972 = vsel %vm971, %v952, %v970
        %vm973 = vcmask 1045509
        %v974 = vsel %vm973, %v956, %v972
        %vm975 = vcmask 1046534
        %v976 = vsel %vm975, %v960, %v974
        %vm977 = vcmask 1047559
        %v978 = vsel %vm977, %v964, %v976
        %vm980 = vcmask 64512
        %981 = vst.msk [vmem:[%s399] sm:$0xff] %vm980, %v978
        %s982 = sand.u32 %s252, 1
        %s983 = scalar_lea.sflag [#allocation5], %s982
        %s984 = sand.u32 %s252, 1
        %s985 = smul.addr %s984, 8
        %s986 = scalar_lea.vmem [#allocation8], %s985
        // Predicated region
        $region65: #{tpu_custom_call.1} parent=55 // pred_check
          %p987 = pneg %p262
        $region66: #{tpu_custom_call.1} parent=55 // pred_check_branch
          %989 = sbr.rel (%p987) target = $region68
        $region67: #{tpu_custom_call.1} parent=55 // pred_region
          %s991 = ssub.s32 128, 128
          %992 = vsyncadd %s983, %s991
          %s993 = sadd.s32 %s34, %s33
          %s994 = smul.addr %s993, 128
          %s995 = scalar_lea.hbm %s9, %s994
          %s997 = sshll.u32 %s986, 4
          %s998 = int_to_ptr.vmem [resolvable:$true] %s997
          %1000 = dma.vmem_to_hbm [thread:$0]  %s998, 128, %s995, %s983
        $region68: #{tpu_custom_call.1} parent=55 // pred_fallthru
          _
      $region56: #{tpu_custom_call.1} parent=5 // pred_fallthru
        _
      %p1001 = scmp.le.s32.totalorder 2, %s24
      // Predicated region
      $region69: #{tpu_custom_call.1} parent=5 // pred_check
        %p1002 = pneg %p1001
      $region70: #{tpu_custom_call.1} parent=5 // pred_check_branch
        %1004 = sbr.rel (%p1002) target = $region72
      $region71: #{tpu_custom_call.1} parent=5 // pred_region
        %s1005 = ssub.s32 %s24, 2
        // Predicated region
        $region73: #{tpu_custom_call.1} parent=71 // pred_check
          %p1006 = pneg %p268
        $region74: #{tpu_custom_call.1} parent=71 // pred_check_branch
          %1008 = sbr.rel (%p1006) target = $region76
        $region75: #{tpu_custom_call.1} parent=71 // pred_region
          %s1009 = sand.u32 %s253, 1
          %s1010 = scalar_lea.sflag [#allocation5], %s1009
          %s1011 = sand.u32 %s253, 1
          %s1012 = smul.addr %s1011, 8
          %s1013 = scalar_lea.vmem [#allocation8], %s1012
          %1014 = dma.done %s1010, 128
        $region76: #{tpu_custom_call.1} parent=71 // pred_fallthru
          _
      $region72: #{tpu_custom_call.1} parent=5 // pred_fallthru
        _
    $region6: #{tpu_custom_call.1} parent=1 // loop_footer
      %s28 = sadd.s32 1, %s24
    $region7: #{tpu_custom_call.1} parent=1 // loop_footer_branch
      %23 = sbr.rel target = $region3
    $region8: #{tpu_custom_call.1} parent=1 // loop_exit
      _
    %1015 = vsyncpa [#allocation4], 1
    %s1016 = scalar_lea.sflag [#allocation4], 1
    %1017 = vsyncpa %s1016, 1
    %1018 = vsyncpa [#allocation7], 1
    %1019 = vsyncpa [#allocation5], 1
    %s1020 = scalar_lea.sflag [#allocation5], 1
    %1021 = vsyncpa %s1020, 1

</llo_original>
